<compile_context>
chip_gen: v6e
topology: v6e:2x2x1
jax: 0.10.0
libtpu: 0.0.40
codegen_flags: <defaults>
</compile_context>

<pallas_src>
import functools

import jax
import jax.numpy as jnp
from jax import lax
from jax.experimental import pallas as pl
from jax.experimental.pallas import tpu as pltpu


def _round_up(x, m):
    return ((x + m - 1) // m) * m


def _cdiv(a, b):
    return (a + b - 1) // b


def _unbiased_nca_kernel(sim_ref, tgt_ref, out_ref, *, scale):
    s = sim_ref[...].astype(jnp.float32)                       # (TB, C)
    if scale != 1.0:                                           # python-level constant
        s = s * scale

    # similarities - similarities.max(dim=1, keepdims=True)[0]  (stability)
    s = s - jnp.max(s, axis=1, keepdims=True)

    tgt = tgt_ref[...]                                         # (TB, 1) int32
    col = lax.broadcasted_iota(jnp.int32, s.shape, 1)          # (TB, C)
    pos_mask = col == tgt                                      # one-hot of target

    # numerator = similarities[row, target]
    numerator = jnp.sum(jnp.where(pos_mask, s, 0.0), axis=1, keepdims=True)  # (TB, 1)

    # Reference zeroes (does NOT remove) the target column of the denominator,
    # so that column contributes exp(0)=1:  denom = sum_{j != t} exp(s_j) + 1.
    # Reusing pos_mask here saves an extra exp + two VPU ops on the (TB,1) path.
    e = jnp.exp(s)                                             # (TB, C)
    denom = jnp.sum(jnp.where(pos_mask, 1.0, e), axis=1, keepdims=True)      # (TB, 1)
    # TODO(synk): on v7x, if bundle dumps show the single EUP (f32 exp) binding
    # before HBM, do the exp in bf16 (args are <= 0 after max-subtraction) and
    # accumulate the row sum in f32.

    # per-row loss = -(numerator - log(denom))
    out_ref[...] = jnp.log(denom) - numerator                  # (TB, 1)


def _vmem_capacity_bytes():
    """Per-TensorCore VMEM capacity; conservative (v7x, 64 MiB) fallback."""
    try:
        info = pltpu.get_tpu_info()
        cap = getattr(info, "vmem_capacity_bytes", None)
        if cap:
            return int(cap)
    except Exception:
        pass
    return 64 * 1024 * 1024


def _auto_block_rows(c, itemsize, budget_bytes, step_bytes_target=8 * 1024 * 1024):
    """Largest row tile whose working set fits the VMEM budget, capped at a
    bytes-per-step target (~8 MiB of similarities per grid step)."""
    c_lanes = _round_up(c, 128)                 # VMEM lane padding of the block
    per_row = 2 * c_lanes * itemsize            # double-buffered input block
    per_row += 5 * c_lanes * 4                  # f32/i32 in-kernel temporaries
                                                # (s, exp(s), iota, mask/where slack)
    per_row += 4 * 128 * 4                      # lane-padded (TB,1) target+loss dbufs
    rows_vmem = budget_bytes // max(per_row, 1)
    rows_step = _cdiv(step_bytes_target, max(c * itemsize, 1))
    rows = min(rows_vmem, rows_step)
    return int(max(8, (rows // 8) * 8))


def unbiased_nca_loss(similarities, targets, *, scale=1.0, margin=0.0,
                      block_rows=None, vmem_budget_bytes=None,
                      vmem_limit_bytes=None, min_grid_steps=4):
    """JAX/Pallas equivalent of UnbiasedNCA(scale, margin)(similarities, targets).

    similarities: (N, C) float array (native dtype kept; bf16 OK) of logits.
    targets:      (N,)   int array of class indices in [0, C).
    Returns a scalar float32 loss.
    """
    if margin != 0.0:
        # TODO(synk): the reference margin>0 branch depends on view/advanced-indexing
        # shapes that are ill-defined for general (N, C) inputs; only margin == 0
        # (the UnbiasedNCA default) is supported.
        raise NotImplementedError("margin > 0 not supported")

    n, c = similarities.shape
    itemsize = jnp.dtype(similarities.dtype).itemsize

    # Generation-aware VMEM budgeting: 50% of per-TC VMEM for the tile working
    # set, 75% as the Mosaic scoped limit.
    cap = _vmem_capacity_bytes()
    if vmem_budget_bytes is None:
        vmem_budget_bytes = cap // 2
    if vmem_limit_bytes is None:
        vmem_limit_bytes = (cap * 3) // 4

    if block_rows is None:
        block_rows = _auto_block_rows(c, itemsize, int(vmem_budget_bytes))
    # Guarantee >= min_grid_steps grid steps (>= 2 blocks per TC on v7x megacore)
    # so the BlockSpec pipeline can overlap the input DMA with compute.
    steps_cap = _round_up(max(_cdiv(n, min_grid_steps), 8), 8)
    block_rows = max(8, min(int(block_rows), steps_cap))
    block_rows = (block_rows // 8) * 8

    # Pad N to a multiple of block_rows (padded rows are discarded before the mean).
    n_pad = _round_up(n, block_rows)
    num_blocks = n_pad // block_rows

    sims = similarities
    tgts = targets.astype(jnp.int32).reshape(n, 1)
    if n_pad != n:
        sims = jnp.pad(sims, ((0, n_pad - n), (0, 0)))
        tgts = jnp.pad(tgts, ((0, n_pad - n), (0, 0)))

    # TODO(synk): for C so large that the 8-row floor still overflows the VMEM
    # budget, add a second grid axis over C (rows "parallel", C "arbitrary") with
    # an online log-sum-exp accumulator in VMEM scratch.
    # TODO(synk): targets/per-row-loss blocks are kept (TB,1) column-shaped; a
    # lane-dense (1,TB) layout would remove the strided DMAs / masked stores but
    # needs an in-kernel skinny relayout -- second-order once the similarity
    # tiles are multiple MiB (output traffic is 1/C of the input traffic).
    kernel = functools.partial(_unbiased_nca_kernel, scale=float(scale))
    cost = pl.CostEstimate(
        flops=int(5 * n_pad * c),
        transcendentals=int(n_pad * c),
        bytes_accessed=int(n_pad * c * itemsize + 2 * n_pad * 4),
    )
    losses = pl.pallas_call(
        kernel,
        out_shape=jax.ShapeDtypeStruct((n_pad, 1), jnp.float32),
        grid=(num_blocks,),
        in_specs=[
            # TODO(synk): when per-step blocks end up small (tiny C), sweep
            # pipeline_mode=pl.Buffered(3) on this spec.
            pl.BlockSpec((block_rows, c), lambda i: (i, 0)),
            pl.BlockSpec((block_rows, 1), lambda i: (i, 0)),
        ],
        out_specs=pl.BlockSpec((block_rows, 1), lambda i: (i, 0)),
        compiler_params=pltpu.CompilerParams(
            dimension_semantics=("parallel",),   # independent blocks -> megacore-able
            vmem_limit_bytes=int(vmem_limit_bytes),
        ),
        cost_estimate=cost,
    )(sims, tgts)

    # torch.mean(losses) over the true (un-padded) rows.
    return jnp.mean(losses[:n, 0])


def _reference(similarities, targets, scale=1.0):
    # Pure-JAX transcription of the PyTorch forward (margin=0 path).
    s = scale * similarities.astype(jnp.float32)
    s = s - jnp.max(s, axis=1, keepdims=True)
    rows = jnp.arange(s.shape[0])
    numerator = s[rows, targets]
    denom = s.at[rows, targets].set(0.0)
    losses = -(numerator - jnp.log(jnp.exp(denom).sum(-1)))
    return jnp.mean(losses)


if __name__ == "__main__":
    key = jax.random.PRNGKey(0)
    k1, k2, k3, k4, k5, k6 = jax.random.split(key, 6)

    # UnbiasedNCA has no learnable weights; its deterministic defaults are
    # scale=1.0, margin=0.0.  Test 1: small classification shapes, f32, defaults.
    N, C = 16, 32
    sims = jax.random.normal(k1, (N, C), dtype=jnp.float32)
    tgts = jax.random.randint(k2, (N,), 0, C, dtype=jnp.int32)
    loss = jax.block_until_ready(unbiased_nca_loss(sims, tgts, scale=1.0, margin=0.0))
    ref = _reference(sims, tgts, 1.0)
    assert jnp.allclose(loss, ref, atol=1e-5, rtol=1e-5), (loss, ref)

    # Test 2: bf16 input, N not a multiple of block_rows, explicit block_rows,
    # scale != 1 (native-dtype path, padding path, multi-step "parallel" grid).
    N2, C2 = 19, 32
    sims2 = jax.random.normal(k3, (N2, C2), dtype=jnp.bfloat16)
    tgts2 = jax.random.randint(k4, (N2,), 0, C2, dtype=jnp.int32)
    loss2 = jax.block_until_ready(
        unbiased_nca_loss(sims2, tgts2, scale=2.0, margin=0.0, block_rows=8))
    ref2 = _reference(sims2, tgts2, 2.0)
    assert jnp.allclose(loss2, ref2, atol=1e-4, rtol=1e-4), (loss2, ref2)

    # Test 3: auto tile sizing with >= 4 grid steps and C not a lane multiple.
    N3, C3 = 96, 160
    sims3 = jax.random.normal(k5, (N3, C3), dtype=jnp.float32)
    tgts3 = jax.random.randint(k6, (N3,), 0, C3, dtype=jnp.int32)
    loss3 = jax.block_until_ready(unbiased_nca_loss(sims3, tgts3, scale=0.5))
    ref3 = _reference(sims3, tgts3, 0.5)
    assert jnp.allclose(loss3, ref3, atol=1e-5, rtol=1e-5), (loss3, ref3)

    print("KERNEL_OK")
</pallas_src>

<mosaic_0001>
module attributes {stable_mosaic.version = 11 : i64} {
  func.func @_unbiased_nca_kernel(%arg0: i32, %arg1: memref<8x32xf32, #tpu.memory_space<vmem>>, %arg2: memref<8x1xi32, #tpu.memory_space<vmem>>, %arg3: memref<8x1xf32, #tpu.memory_space<vmem>>) attributes {dimension_semantics = [#tpu.dimension_semantics<parallel>], iteration_bounds = array<i64: 2>, scalar_prefetch = 0 : i64, scratch_operands = 0 : i64, tpu.core_type = #tpu.core_type<tc>, window_params = [{transform_indices = @transform_0, window_bounds = array<i64: 8, 32>}, {transform_indices = @transform_1, window_bounds = array<i64: 8, 1>}, {transform_indices = @transform_2, window_bounds = array<i64: 8, 1>}]} {
    %c0 = arith.constant 0 : index
    %c0_0 = arith.constant 0 : index
    %0 = vector.load %arg1[%c0, %c0_0] : memref<8x32xf32, #tpu.memory_space<vmem>>, vector<8x32xf32>
    %cst = arith.constant dense<0xFF800000> : vector<8xf32>
    %1 = vector.multi_reduction <maximumf>, %0, %cst [1] : vector<8x32xf32> to vector<8xf32>
    %2 = vector.shape_cast %1 : vector<8xf32> to vector<8x1xf32>
    %3 = vector.broadcast %2 : vector<8x1xf32> to vector<8x32xf32>
    %4 = arith.subf %0, %3 : vector<8x32xf32>
    %c0_1 = arith.constant 0 : index
    %c0_2 = arith.constant 0 : index
    %5 = vector.load %arg2[%c0_1, %c0_2] : memref<8x1xi32, #tpu.memory_space<vmem>>, vector<8x1xi32>
    %6 = tpu.iota {dimensions = array<i32: 1>} : vector<8x32xi32>
    %7 = vector.broadcast %5 : vector<8x1xi32> to vector<8x32xi32>
    %8 = arith.cmpi eq, %6, %7 : vector<8x32xi32>
    %cst_3 = arith.constant 0.000000e+00 : f32
    %9 = vector.broadcast %cst_3 : f32 to vector<8x32xf32>
    %10 = arith.select %8, %4, %9 : vector<8x32xi1>, vector<8x32xf32>
    %cst_4 = arith.constant dense<0.000000e+00> : vector<8xf32>
    %11 = vector.multi_reduction <add>, %10, %cst_4 [1] : vector<8x32xf32> to vector<8xf32>
    %12 = vector.shape_cast %11 : vector<8xf32> to vector<8x1xf32>
    %13 = math.exp %4 : vector<8x32xf32>
    %cst_5 = arith.constant 1.000000e+00 : f32
    %14 = vector.broadcast %cst_5 : f32 to vector<8x32xf32>
    %15 = arith.select %8, %14, %13 : vector<8x32xi1>, vector<8x32xf32>
    %cst_6 = arith.constant dense<0.000000e+00> : vector<8xf32>
    %16 = vector.multi_reduction <add>, %15, %cst_6 [1] : vector<8x32xf32> to vector<8xf32>
    %17 = vector.shape_cast %16 : vector<8xf32> to vector<8x1xf32>
    %18 = math.log %17 : vector<8x1xf32>
    %19 = arith.subf %18, %12 : vector<8x1xf32>
    %c0_7 = arith.constant 0 : index
    %c0_8 = arith.constant 0 : index
    %20 = vector.load %arg3[%c0_7, %c0_8] : memref<8x1xf32, #tpu.memory_space<vmem>>, vector<8x1xf32>
    tpu.vector_store %arg3[%c0_7, %c0_8], %19 {strides = array<i32>} : memref<8x1xf32, #tpu.memory_space<vmem>>, vector<8x1xf32>,
    return
  }
  func.func @transform_0(%arg0: i32) -> (i32, i32) {
    %c0_i32 = arith.constant 0 : i32
    %c0_i32_0 = arith.constant 0 : i32
    return %arg0, %c0_i32 : i32, i32
  }
  func.func @transform_1(%arg0: i32) -> (i32, i32) {
    %c0_i32 = arith.constant 0 : i32
    %c0_i32_0 = arith.constant 0 : i32
    return %arg0, %c0_i32 : i32, i32
  }
  func.func @transform_2(%arg0: i32) -> (i32, i32) {
    %c0_i32 = arith.constant 0 : i32
    %c0_i32_0 = arith.constant 0 : i32
    return %arg0, %c0_i32 : i32, i32
  }
}

</mosaic_0001>

<llo_original>
// kernel: tpu_custom_call.1
$region0: #{tpu_custom_call.1}
  #allocation0 [shape = 'u32[]', space=smem, size = 0x4, offset = 0x4, fixed_abs, tag = 'smem constant byte address 0x4 - core index']
  #allocation1 [shape = 'u32[144,128]{1,0:T(1,128)}', space=vmem, size = 0x12000, scoped, tag = 'internal scratch']
  %s0 = inlined_call_operand.vmem [shape: f32[16,32], index: 0, kind: input, shape index: {}]
  %s1 = inlined_call_operand.vmem [shape: s32[16,1], index: 1, kind: input, shape index: {}]
  %s2 = inlined_call_operand.vmem [shape: f32[16,1], index: 2, kind: output, shape index: {}]
  %s3 = sld [smem:[#allocation0]]
  $region41: #{tpu_custom_call.1} parent=0
    _
  %s5 = ssub.s32 1, %s3
  %s6 = scalar_select 0, %s5, %s3
  loop: start=0, step=1, limit=4
  $region2: #{tpu_custom_call.1} parent=0 // loop_pre_header
    _
  $region3: #{tpu_custom_call.1} parent=0 // loop_header
    %s8 = sphi 0, %s12
    %p9 = scmp.ge.s32.totalorder %s8, 4
    %s18 = sphi 0, %s20
    %s21 = sphi 0, %s18
    %s22 = sphi 0, %s21
    %s38 = sphi 0, %s22
    %s44 = sphi 0, %s46
    %s47 = sphi 0, %s44
    %s48 = sphi 0, %s47
    %s64 = sphi 0, %s48
    %s70 = sphi 0, %s72
    %s73 = sphi 0, %s70
    %s74 = sphi 0, %s73
    %s90 = sphi 0, %s74
  $region4: #{tpu_custom_call.1} parent=0 // loop_header_branch
    %11 = sbr.rel (%p9) target = $region8
  $region5: #{tpu_custom_call.1} parent=0 // loop_body
    %s13 = ssub.s32 %s8, 1
    %s14 = ssub.s32 %s8, 2
    %s15 = sadd.s32 %s8, 1
    %s16 = ssub.s32 %s8, %s15
    %p17 = scmp.eq.s32.totalorder %s16, 0
    %s19 = sadd.s32 %s18, 1
    %s20 = scalar_select %p17, %s18, %s19
    %p23 = pneg %p17
    %p24 = scmp.eq.s32.totalorder %s8, 1
    %p25 = por %p23, %p24
    %p26 = scmp.ne.s32.totalorder %s18, %s21
    %p27 = scmp.eq.s32.totalorder %s8, 0
    %p28 = por %p26, %p27
    %p29 = scmp.ne.s32.totalorder %s18, %s21
    %p30 = scmp.eq.s32.totalorder %s13, 1
    %p31 = por %p29, %p30
    %p32 = scmp.ne.s32.totalorder %s21, %s22
    %p33 = scmp.eq.s32.totalorder %s13, 0
    %p34 = por %p32, %p33
    %p35 = scmp.ne.s32.totalorder %s21, %s22
    %p36 = scmp.eq.s32.totalorder %s14, 1
    %p37 = por %p35, %p36
    %p39 = scmp.ne.s32.totalorder %s22, %s38
    %p40 = scmp.eq.s32.totalorder %s14, 0
    %p41 = por %p39, %p40
    %s42 = ssub.s32 %s8, %s15
    %p43 = scmp.eq.s32.totalorder %s42, 0
    %s45 = sadd.s32 %s44, 1
    %s46 = scalar_select %p43, %s44, %s45
    %p49 = pneg %p43
    %p50 = scmp.eq.s32.totalorder %s8, 1
    %p51 = por %p49, %p50
    %p52 = scmp.ne.s32.totalorder %s44, %s47
    %p53 = scmp.eq.s32.totalorder %s8, 0
    %p54 = por %p52, %p53
    %p55 = scmp.ne.s32.totalorder %s44, %s47
    %p56 = scmp.eq.s32.totalorder %s13, 1
    %p57 = por %p55, %p56
    %p58 = scmp.ne.s32.totalorder %s47, %s48
    %p59 = scmp.eq.s32.totalorder %s13, 0
    %p60 = por %p58, %p59
    %p61 = scmp.ne.s32.totalorder %s47, %s48
    %p62 = scmp.eq.s32.totalorder %s14, 1
    %p63 = por %p61, %p62
    %p65 = scmp.ne.s32.totalorder %s48, %s64
    %p66 = scmp.eq.s32.totalorder %s14, 0
    %p67 = por %p65, %p66
    %s68 = ssub.s32 %s8, %s15
    %p69 = scmp.eq.s32.totalorder %s68, 0
    %s71 = sadd.s32 %s70, 1
    %s72 = scalar_select %p69, %s70, %s71
    %p75 = pneg %p69
    %p76 = scmp.eq.s32.totalorder %s8, 1
    %p77 = por %p75, %p76
    %p78 = scmp.ne.s32.totalorder %s70, %s73
    %p79 = scmp.eq.s32.totalorder %s8, 0
    %p80 = por %p78, %p79
    %p81 = scmp.ne.s32.totalorder %s70, %s73
    %p82 = scmp.eq.s32.totalorder %s13, 1
    %p83 = por %p81, %p82
    %p84 = scmp.ne.s32.totalorder %s73, %s74
    %p85 = scmp.eq.s32.totalorder %s13, 0
    %p86 = por %p84, %p85
    %p87 = scmp.ne.s32.totalorder %s73, %s74
    %p88 = scmp.eq.s32.totalorder %s14, 1
    %p89 = por %p87, %p88
    %p91 = scmp.ne.s32.totalorder %s74, %s90
    %p92 = scmp.eq.s32.totalorder %s14, 0
    %p93 = por %p91, %p92
    %p94 = scmp.le.s32.totalorder 1, %s8
    %p95 = scmp.lt.s32.totalorder %s8, 3
    %p96 = pnand %p94, %p95
    %p97 = pneg %p96
    // Predicated region
    $region9: #{tpu_custom_call.1} parent=5 // pred_check
      _
    $region10: #{tpu_custom_call.1} parent=5 // pred_check_branch
      %99 = sbr.rel (%p96) target = $region12
    $region11: #{tpu_custom_call.1} parent=5 // pred_region
      %s100 = ssub.s32 %s8, 1
    $region12: #{tpu_custom_call.1} parent=5 // pred_fallthru
      _
    %p101 = scmp.lt.s32.totalorder %s8, 2
    // Predicated region
    $region13: #{tpu_custom_call.1} parent=5 // pred_check
      %p102 = pneg %p101
    $region14: #{tpu_custom_call.1} parent=5 // pred_check_branch
      %104 = sbr.rel (%p102) target = $region16
    $region15: #{tpu_custom_call.1} parent=5 // pred_region
      // Predicated region
      $region17: #{tpu_custom_call.1} parent=15 // pred_check
        %p105 = pneg %p28
      $region18: #{tpu_custom_call.1} parent=15 // pred_check_branch
        %107 = sbr.rel (%p105) target = $region20
      $region19: #{tpu_custom_call.1} parent=15 // pred_region
        %p108 = scmp.lt.s32.totalorder %s8, 1
        %s109 = scalar_select %p108, %s8, 1
        %s110 = smul.addr %s109, 8
        %s111 = scalar_lea.vmem %s0, %s110
      $region20: #{tpu_custom_call.1} parent=15 // pred_fallthru
        _
      // Predicated region
      $region21: #{tpu_custom_call.1} parent=15 // pred_check
        %p112 = pneg %p54
      $region22: #{tpu_custom_call.1} parent=15 // pred_check_branch
        %114 = sbr.rel (%p112) target = $region24
      $region23: #{tpu_custom_call.1} parent=15 // pred_region
        %p115 = scmp.lt.s32.totalorder %s8, 1
        %s116 = scalar_select %p115, %s8, 1
        %s117 = smul.addr %s116, 8
        %s118 = scalar_lea.vmem %s1, %s117
      $region24: #{tpu_custom_call.1} parent=15 // pred_fallthru
        _
    $region16: #{tpu_custom_call.1} parent=5 // pred_fallthru
      _
    %p119 = scmp.le.s32.totalorder 1, %s8
    %p120 = scmp.lt.s32.totalorder %s8, 3
    %p121 = pnand %p119, %p120
    %p122 = pneg %p121
    // Predicated region
    $region25: #{tpu_custom_call.1} parent=5 // pred_check
      _
    $region26: #{tpu_custom_call.1} parent=5 // pred_check_branch
      %124 = sbr.rel (%p121) target = $region28
    $region27: #{tpu_custom_call.1} parent=5 // pred_region
      %s125 = ssub.s32 %s8, 1
      %p126 = scmp.lt.s32.totalorder %s13, 1
      %s127 = scalar_select %p126, %s13, 1
      %s128 = smul.addr %s127, 8
      %s129 = scalar_lea.vmem %s0, %s128
      %p130 = pneg %p34
      %p131 = pneg %p31
      %p132 = scmp.lt.s32.totalorder %s13, 1
      %s133 = scalar_select %p132, %s13, 1
      %s134 = smul.addr %s133, 8
      %s135 = scalar_lea.vmem %s1, %s134
      %p136 = pneg %p60
      %p137 = pneg %p57
      %p138 = pneg %p86
      %p139 = pneg %p83
      %p140 = scmp.lt.s32.totalorder %s13, 1
      %s141 = scalar_select %p140, %s13, 1
      %s142 = smul.addr %s141, 8
      %s143 = scalar_lea.vmem %s2, %s142
      %p144 = scmp.lt.s32.totalorder %s13, 1
      %s145 = scalar_select %p144, %s13, 1
      %s146 = smul.addr %s145, 8
      %s147 = scalar_lea.vmem %s0, %s146
      %p148 = scmp.lt.s32.totalorder %s13, 1
      %s149 = scalar_select %p148, %s13, 1
      %s150 = smul.addr %s149, 8
      %s151 = scalar_lea.vmem %s1, %s150
      %p152 = scmp.lt.s32.totalorder %s13, 1
      %s153 = scalar_select %p152, %s13, 1
      %s154 = smul.addr %s153, 8
      %s155 = scalar_lea.vmem %s2, %s154
      %v156 = vld [vmem:[%s147] sm:$0xff]
      %vm157 = vcmask 261120
      %v158 = vsel %vm157, %v156, -inf
      %159 = vmax.xlane.f32.xlu0 %v158
      %v160 = vpop.xlane.xlu0 %159
      %v161 = vsub.f32 %v156, %v160
      %v162 = vld [vmem:[%s151] sm:$0xff]
      %v163 = vlaneseq
      %v164 = vand.u32 %v163, 127
      %165 = vset.pattern.permute.xlu0 0
      %166 = vperm.xlu0 %165, %v162
      %v167 = vpop.permute.xlu0 %166
      %vm168 = vcmp.eq.s32.totalorder %v164, %v167
      %v169 = vsel %vm168, %v161, 0.0
      %v170 = vsel %vm157, %v169, 0.0
      %171 = vadd.xlane.f32.xlu0 %v170
      %v172 = vpop.xlane.xlu0 %171
      %v173 = vmul.f32 %v161, 1.442695
      %v174 = vpow.pop %v173
      %v175 = vsel %vm168, 1.0, %v174
      %v176 = vsel %vm157, %v175, 0.0
      %177 = vadd.xlane.f32.xlu0 %v176
      %v178 = vpop.xlane.xlu0 %177
      %v179 = vlog2.pop %v178
      %v180 = vmul.f32 %v179, 0.6931472
      %v181 = vsub.f32 %v180, %v172
      %vm182 = vcmask 7168
      %183 = vst.msk [vmem:[%s155] sm:$0xff] %vm182, %v181
      %p184 = scmp.lt.s32.totalorder %s13, 1
      %s185 = scalar_select %p184, %s13, 1
      %s186 = smul.addr %s185, 8
      %s187 = scalar_lea.vmem %s2, %s186
      // Predicated region
      $region29: #{tpu_custom_call.1} parent=27 // pred_check
        %p188 = pneg %p83
      $region30: #{tpu_custom_call.1} parent=27 // pred_check_branch
        %190 = sbr.rel (%p188) target = $region32
      $region31: #{tpu_custom_call.1} parent=27 // pred_region
        _
      $region32: #{tpu_custom_call.1} parent=27 // pred_fallthru
        _
    $region28: #{tpu_custom_call.1} parent=5 // pred_fallthru
      _
    %p191 = scmp.le.s32.totalorder 2, %s8
    // Predicated region
    $region33: #{tpu_custom_call.1} parent=5 // pred_check
      %p192 = pneg %p191
    $region34: #{tpu_custom_call.1} parent=5 // pred_check_branch
      %194 = sbr.rel (%p192) target = $region36
    $region35: #{tpu_custom_call.1} parent=5 // pred_region
      %s195 = ssub.s32 %s8, 2
      // Predicated region
      $region37: #{tpu_custom_call.1} parent=35 // pred_check
        %p196 = pneg %p89
      $region38: #{tpu_custom_call.1} parent=35 // pred_check_branch
        %198 = sbr.rel (%p196) target = $region40
      $region39: #{tpu_custom_call.1} parent=35 // pred_region
        %p199 = scmp.lt.s32.totalorder %s14, 1
        %s200 = scalar_select %p199, %s14, 1
        %s201 = smul.addr %s200, 8
        %s202 = scalar_lea.vmem %s2, %s201
      $region40: #{tpu_custom_call.1} parent=35 // pred_fallthru
        _
    $region36: #{tpu_custom_call.1} parent=5 // pred_fallthru
      _
  $region6: #{tpu_custom_call.1} parent=0 // loop_footer
    %s12 = sadd.s32 1, %s8
  $region7: #{tpu_custom_call.1} parent=0 // loop_footer_branch
    %7 = sbr.rel target = $region3
  $region8: #{tpu_custom_call.1} parent=0 // loop_exit
    _

</llo_original>
